<compile_context>
chip_gen: v5e
topology: v5e:2x2
jax: 0.10.0
libtpu: 0.0.40
codegen_flags: <defaults>
</compile_context>

<pallas_src>
import functools

import jax
import jax.numpy as jnp
from jax.experimental import pallas as pl
from jax.experimental.pallas import tpu as pltpu


def _tv_loss_kernel(x_ref, o_ref, *, D, block_B, total_B, scale):
    step = pl.program_id(0)

    @pl.when(step == 0)
    def _():
        o_ref[...] = jnp.zeros_like(o_ref)

    x = x_ref[...].astype(jnp.float32)            # (block_B, L), L multiple of 128
    L = x.shape[1]
    DD = D * D

    # Lane j holds element j of the flattened attention row; map element
    # i = j - 1 (lane 0 is the CLS column, removed by the masks below).
    col = jax.lax.broadcasted_iota(jnp.int32, (1, L), 1)

    # Vertical (map-row) neighbour: x[:, j + D].
    x_dn = pltpu.roll(x, shift=L - D, axis=1)     # x_dn[:, j] = x[:, (j + D) % L]
    v_ok = jnp.logical_and(col >= 1, col <= (D - 1) * D)
    dh = jnp.where(v_ok, x - x_dn, 0.0)

    # Horizontal (map-col) neighbour: x[:, j + 1].  j % D == 0 covers the CLS
    # lane and each map row's last column; j > D*D is slack past the map.
    x_rt = pltpu.roll(x, shift=L - 1, axis=1)     # x_rt[:, j] = x[:, (j + 1) % L]
    h_ok = jnp.logical_and(col <= DD, col % D != 0)
    dw = jnp.where(h_ok, x - x_rt, 0.0)

    sq = dh * dh + dw * dw

    if total_B % block_B != 0:                    # static: only a ragged edge chunk
        rows_left = total_B - step * block_B
        row = jax.lax.broadcasted_iota(jnp.int32, (block_B, 1), 0)
        sq = jnp.where(row < rows_left, sq, 0.0)

    tot = jnp.sum(jnp.sum(sq, axis=1, keepdims=True), axis=0, keepdims=True)
    o_ref[...] += scale * tot


def tv_loss(dot_qk, attn_dim):
    """Pallas TVLoss forward. dot_qk: (bs, nh, S, S) with S = attn_dim**2 + 1."""
    bs, nh, S, S2 = dot_qk.shape
    D = attn_dim
    assert S == S2 and S == D * D + 1, "dot_qk last dims must be attn_dim**2 + 1"
    B = bs * nh

    # Free, contiguous collapse; the row-0 / drop-CLS gather happens inside the
    # pallas_call (only the first L_blk lanes of each map's row are DMA'd).
    flat = dot_qk.reshape(B, S * S)

    L_blk = pl.cdiv(D * D + 1, 128) * 128         # lanes covering CLS + D*D map

    itemsize = jnp.dtype(dot_qk.dtype).itemsize
    sublane = {4: 8, 2: 16, 1: 32}.get(itemsize, 8)
    # ~1 MiB input tile per grid step; ~8x f32 temporaries + double buffering
    # still leave large headroom on v7x (64 MiB VMEM / 32 MiB scoped default).
    max_rows = max(sublane, ((1 << 20) // (L_blk * itemsize)) // sublane * sublane)
    block_B = B if B <= max_rows else max_rows
    num_chunks = pl.cdiv(B, block_B)

    kernel = functools.partial(_tv_loss_kernel, D=D, block_B=block_B,
                               total_B=B, scale=0.5 / B)
    out = pl.pallas_call(
        kernel,
        out_shape=jax.ShapeDtypeStruct((1, 1), jnp.float32),
        grid_spec=pltpu.PrefetchScalarGridSpec(
            num_scalar_prefetch=0,
            grid=(num_chunks,),
            in_specs=[pl.BlockSpec((block_B, L_blk), lambda i: (i, 0))],
            out_specs=pl.BlockSpec((1, 1), lambda i: (0, 0)),
        ),
        compiler_params=pltpu.CompilerParams(
            dimension_semantics=("arbitrary",)),
    )(flat)
    # TODO(synk): on v7x with very large bs*nh, split the chunk axis across the
    # two TensorCores ("parallel" leading axis + per-core partial sums).
    return out[0, 0]


def _reference_tv_loss(dot_qk, attn_dim):
    bs, nh, _, _ = dot_qk.shape
    D = attn_dim
    x = dot_qk[:, :, 0, 1:].reshape(bs, nh, D, D)
    h_tv = 0.5 * jnp.sum((x[:, :, :-1, :] - x[:, :, 1:, :]) ** 2, axis=(2, 3))
    w_tv = 0.5 * jnp.sum((x[:, :, :, :-1] - x[:, :, :, 1:]) ** 2, axis=(2, 3))
    return jnp.mean(h_tv + w_tv)


if __name__ == "__main__":
    # Small shapes consistent with the module default: attn_dim=14 -> S = 197.
    attn_dim = 14
    bs, nh = 2, 4
    S = attn_dim * attn_dim + 1

    key = jax.random.PRNGKey(0)
    dot_qk = jax.random.normal(key, (bs, nh, S, S), dtype=jnp.float32)

    tv = jax.jit(tv_loss, static_argnums=1)
    result = jax.block_until_ready(tv(dot_qk, attn_dim))

    ref = _reference_tv_loss(dot_qk, attn_dim)
    assert jnp.allclose(result, ref, rtol=1e-4, atol=1e-4), (result, ref)

    print("KERNEL_OK")
</pallas_src>

<mosaic_0001>
module attributes {stable_mosaic.version = 11 : i64} {
  func.func @_tv_loss_kernel(%arg0: i32, %arg1: memref<8x256xf32, #tpu.memory_space<vmem>>, %arg2: memref<1x1xf32, #tpu.memory_space<vmem>>) attributes {dimension_semantics = [#tpu.dimension_semantics<arbitrary>], iteration_bounds = array<i64: 1>, scalar_prefetch = 0 : i64, scratch_operands = 0 : i64, tpu.core_type = #tpu.core_type<tc>, window_params = [{transform_indices = @transform_0, window_bounds = array<i64: 8, 256>}, {pipeline_mode = #tpu.pipeline_mode<synchronous>, transform_indices = @transform_1, window_bounds = array<i64: 1, 1>}]} {
    %c0_i32 = arith.constant 0 : i32
    %0 = arith.cmpi eq, %arg0, %c0_i32 : i32
    %1 = arith.extui %0 : i1 to i32
    %c0_i32_0 = arith.constant 0 : i32
    %2 = arith.cmpi ne, %1, %c0_i32_0 : i32
    scf.if %2 {
      %cst_16 = arith.constant 0.000000e+00 : f32
      %55 = vector.broadcast %cst_16 : f32 to vector<1x1xf32>
      %c0_17 = arith.constant 0 : index
      %c0_18 = arith.constant 0 : index
      %56 = vector.load %arg2[%c0_17, %c0_18] : memref<1x1xf32, #tpu.memory_space<vmem>>, vector<1x1xf32>
      tpu.vector_store %arg2[%c0_17, %c0_18], %55 {strides = array<i32>} : memref<1x1xf32, #tpu.memory_space<vmem>>, vector<1x1xf32>,
    } else {
    }
    %c0 = arith.constant 0 : index
    %c0_1 = arith.constant 0 : index
    %3 = vector.load %arg1[%c0, %c0_1] : memref<8x256xf32, #tpu.memory_space<vmem>>, vector<8x256xf32>
    %4 = tpu.iota {dimensions = array<i32: 1>} : vector<1x256xi32>
    %c242_i32 = arith.constant 242 : i32
    %5 = tpu.dynamic_rotate %3 by %c242_i32 dim 1 : vector<8x256xf32>, i32 -> vector<8x256xf32>
    %c1_i32 = arith.constant 1 : i32
    %6 = vector.broadcast %c1_i32 : i32 to vector<1x256xi32>
    %7 = arith.cmpi sge, %4, %6 : vector<1x256xi32>
    %c182_i32 = arith.constant 182 : i32
    %8 = vector.broadcast %c182_i32 : i32 to vector<1x256xi32>
    %9 = arith.cmpi sle, %4, %8 : vector<1x256xi32>
    %10 = arith.andi %7, %9 : vector<1x256xi1>
    %11 = arith.subf %3, %5 : vector<8x256xf32>
    %cst = arith.constant 0.000000e+00 : f32
    %12 = vector.shape_cast %10 : vector<1x256xi1> to vector<1x256xi1>
    %13 = vector.broadcast %12 : vector<1x256xi1> to vector<8x256xi1>
    %14 = vector.broadcast %cst : f32 to vector<8x256xf32>
    %15 = arith.select %13, %11, %14 : vector<8x256xi1>, vector<8x256xf32>
    %c255_i32 = arith.constant 255 : i32
    %16 = tpu.dynamic_rotate %3 by %c255_i32 dim 1 : vector<8x256xf32>, i32 -> vector<8x256xf32>
    %c196_i32 = arith.constant 196 : i32
    %17 = vector.broadcast %c196_i32 : i32 to vector<1x256xi32>
    %18 = arith.cmpi sle, %4, %17 : vector<1x256xi32>
    %c14_i32 = arith.constant 14 : i32
    %c0_i32_2 = arith.constant 0 : i32
    %19 = arith.cmpi eq, %c14_i32, %c0_i32_2 : i32
    %c1_i32_3 = arith.constant 1 : i32
    %20 = arith.select %19, %c1_i32_3, %c14_i32 : i32
    %21 = vector.broadcast %20 : i32 to vector<1x256xi32>
    %22 = arith.remsi %4, %21 : vector<1x256xi32>
    %c0_i32_4 = arith.constant 0 : i32
    %23 = vector.broadcast %c0_i32_4 : i32 to vector<1x256xi32>
    %24 = arith.cmpi ne, %22, %23 : vector<1x256xi32>
    %c0_i32_5 = arith.constant 0 : i32
    %25 = vector.broadcast %c0_i32_5 : i32 to vector<1x256xi32>
    %26 = arith.cmpi slt, %22, %25 : vector<1x256xi32>
    %c0_i32_6 = arith.constant 0 : i32
    %27 = arith.cmpi slt, %20, %c0_i32_6 : i32
    %28 = vector.broadcast %27 : i1 to vector<1x256xi1>
    %29 = vector.broadcast %28 : vector<1x256xi1> to vector<1x256xi1>
    %30 = arith.xori %26, %29 : vector<1x256xi1>
    %31 = arith.andi %30, %24 : vector<1x256xi1>
    %32 = vector.broadcast %20 : i32 to vector<1x256xi32>
    %33 = arith.addi %22, %32 : vector<1x256xi32>
    %34 = arith.select %31, %33, %22 : vector<1x256xi1>, vector<1x256xi32>
    %c0_i32_7 = arith.constant 0 : i32
    %35 = vector.broadcast %c0_i32_7 : i32 to vector<1x256xi32>
    %36 = arith.cmpi ne, %34, %35 : vector<1x256xi32>
    %37 = arith.andi %18, %36 : vector<1x256xi1>
    %38 = arith.subf %3, %16 : vector<8x256xf32>
    %cst_8 = arith.constant 0.000000e+00 : f32
    %39 = vector.shape_cast %37 : vector<1x256xi1> to vector<1x256xi1>
    %40 = vector.broadcast %39 : vector<1x256xi1> to vector<8x256xi1>
    %41 = vector.broadcast %cst_8 : f32 to vector<8x256xf32>
    %42 = arith.select %40, %38, %41 : vector<8x256xi1>, vector<8x256xf32>
    %43 = arith.mulf %15, %15 : vector<8x256xf32>
    %44 = arith.mulf %42, %42 : vector<8x256xf32>
    %45 = arith.addf %43, %44 : vector<8x256xf32>
    %cst_9 = arith.constant dense<0.000000e+00> : vector<8xf32>
    %46 = vector.multi_reduction <add>, %45, %cst_9 [1] : vector<8x256xf32> to vector<8xf32>
    %47 = vector.shape_cast %46 : vector<8xf32> to vector<8x1xf32>
    %cst_10 = arith.constant dense<0.000000e+00> : vector<1xf32>
    %48 = vector.multi_reduction <add>, %47, %cst_10 [0] : vector<8x1xf32> to vector<1xf32>
    %49 = vector.shape_cast %48 : vector<1xf32> to vector<1x1xf32>
    %c0_11 = arith.constant 0 : index
    %c0_12 = arith.constant 0 : index
    %50 = vector.load %arg2[%c0_11, %c0_12] : memref<1x1xf32, #tpu.memory_space<vmem>>, vector<1x1xf32>
    %cst_13 = arith.constant 6.250000e-02 : f32
    %51 = vector.broadcast %cst_13 : f32 to vector<1x1xf32>
    %52 = arith.mulf %51, %49 : vector<1x1xf32>
    %53 = arith.addf %50, %52 : vector<1x1xf32>
    %c0_14 = arith.constant 0 : index
    %c0_15 = arith.constant 0 : index
    %54 = vector.load %arg2[%c0_14, %c0_15] : memref<1x1xf32, #tpu.memory_space<vmem>>, vector<1x1xf32>
    tpu.vector_store %arg2[%c0_14, %c0_15], %53 {strides = array<i32>} : memref<1x1xf32, #tpu.memory_space<vmem>>, vector<1x1xf32>,
    return
  }
  func.func @transform_0(%arg0: i32) -> (i32, i32) {
    %c0_i32 = arith.constant 0 : i32
    %c0_i32_0 = arith.constant 0 : i32
    return %arg0, %c0_i32 : i32, i32
  }
  func.func @transform_1(%arg0: i32) -> (i32, i32) {
    %c0_i32 = arith.constant 0 : i32
    %c0_i32_0 = arith.constant 0 : i32
    %c0_i32_1 = arith.constant 0 : i32
    return %c0_i32, %c0_i32_0 : i32, i32
  }
}

</mosaic_0001>

<llo_original>
// kernel: tv_loss.1
$region0: #{tv_loss.1}
  #allocation0 [shape = 'u32[]', space=smem, size = 0x4, offset = 0x4, fixed_abs, tag = 'smem constant byte address 0x4 - core index']
  #allocation1 [shape = 'u32[72,128]{1,0:T(1,128)}', space=vmem, size = 0x9000, scoped, tag = 'internal scratch']
  %s0 = inlined_call_operand.vmem [shape: f32[8,38809], index: 0, kind: input, shape index: {}]
  %s1 = inlined_call_operand.hbm [shape: f32[1,1], index: 1, kind: output, shape index: {}]
  %s2 = sld [smem:[#allocation0]]
  $region18: #{tv_loss.1} parent=0
    _
  %s4 = ssub.s32 1, %s2
  %s5 = scalar_select 0, %s4, %s2
  $region1: #{tv_loss.1} parent=0
    #allocation2 [shape = 'u8[512]{0}', space=vmem, size = 0x400, scoped, tag = 'output window, operand 0, single buffered']
    #allocation3 [shape = 's32[1]{0}', space=sflag, size = 0x4, scoped, tag = 'scoped memory for tv_loss.1']
    %6 = vsyncpa [#allocation3], 0
    // Predicated region
    $region2: #{tv_loss.1} parent=1 // pred_check
      _
    $region3: #{tv_loss.1} parent=1 // pred_check_branch
      %8 = sbr.rel (0) target = $region5
    $region4: #{tv_loss.1} parent=1 // pred_region
      _
    $region5: #{tv_loss.1} parent=1 // pred_fallthru
      _
    %p9 = scmp.eq.s32.totalorder 0, 0
    // Predicated region
    $region6: #{tv_loss.1} parent=1 // pred_check
      %p10 = pneg %p9
    $region7: #{tv_loss.1} parent=1 // pred_check_branch
      %12 = sbr.rel (%p10) target = $region9
    $region8: #{tv_loss.1} parent=1 // pred_region
      %vm13 = vcmask 0
      %14 = vst.msk [vmem:[#allocation2] sm:$0x1] %vm13, 0.0
    $region9: #{tv_loss.1} parent=1 // pred_fallthru
      _
    %v15 = vld [vmem:[%s0] sm:$0xff]
    %v16 = vld [vmem:[%s0 + $0x8] sm:$0xff]
    %v17 = vlaneseq
    %v18 = vand.u32 %v17, 127
    %v19 = vadd.s32 %v18, 128
    %20 = vrot.lane.b32.xlu0 %v15, 114
    %v21 = vpop.permute.xlu0 %20
    %22 = vrot.lane.b32.xlu0 %v16, 114
    %v23 = vpop.permute.xlu0 %22
    %vm24 = vcmp.lt.s32.totalorder %v18, 114
    %v25 = vsel %vm24, %v21, %v23
    %v26 = vsel %vm24, %v23, %v21
    %vm27 = vcmp.ge.s32.totalorder %v18, 1
    %vm28 = vcmp.ge.s32.totalorder %v19, 1
    %vm29 = vcmp.le.s32.totalorder %v18, 182
    %vm30 = vcmp.le.s32.totalorder %v19, 182
    %vm31 = vmand %vm27, %vm29
    %vm32 = vmand %vm28, %vm30
    %v33 = vsub.f32 %v15, %v25
    %v34 = vsub.f32 %v16, %v26
    %v35 = vsel %vm31, 1, 0
    %v36 = vsel %vm32, 1, 0
    %vm37 = vcmp.eq.s32.totalorder %v35, 1
    %vm38 = vcmp.eq.s32.totalorder %v36, 1
    %v39 = vsel %vm37, %v33, 0.0
    %v40 = vsel %vm38, %v34, 0.0
    %41 = vrot.lane.b32.xlu0 %v15, 127
    %v42 = vpop.permute.xlu0 %41
    %43 = vrot.lane.b32.xlu0 %v16, 127
    %v44 = vpop.permute.xlu0 %43
    %vm45 = vcmp.lt.s32.totalorder %v18, 127
    %v46 = vsel %vm45, %v42, %v44
    %v47 = vsel %vm45, %v44, %v42
    %vm48 = vcmp.le.s32.totalorder %v18, 196
    %vm49 = vcmp.le.s32.totalorder %v19, 196
    %vm50 = vcmp.lt.s32.totalorder %v18, 0
    %v51 = vsub.s32 0, %v18
    %v52 = vsel %vm50, %v51, %v18
    %v53 = vand.u32 %v52, 65535
    %v54 = vshrl.u32 %v52, 16
    %v56 = vmul.u32 %v53, 9362
    %v57 = vmul.u32 %v53, 37449
    %v58 = vmul.u32 %v54, 9362
    %v59 = vmul.u32 %v54, 37449
    %v60 = vshll.u32 %v57, 16
    %v61 = vshrl.u32 %v57, 16
    %v62 = vshll.u32 %v58, 16
    %v63 = vshrl.u32 %v58, 16
    %vm64 = vc.u32 %v56, %v60
    %v65 = vsel %vm64, 1, 0
    %v66 = vadd.s32 %v56, %v60
    %v67 = vadd.s32 %v59, %v65
    %vm68 = vc.u32 %v66, %v62
    %v69 = vsel %vm68, 1, 0
    %v70 = vadd.s32 %v66, %v62
    %v71 = vadd.s32 %v67, %v69
    %v72 = vadd.s32 %v71, %v61
    %v73 = vadd.s32 %v72, %v63
    %vm74 = vc.u32 %v70, 2454267026
    %v75 = vsel %vm74, 1, 0
    %v76 = vadd.s32 %v73, %v75
    %v77 = vshrl.u32 %v76, 3
    %v78 = vmul.u32 %v77, 14
    %v79 = vsub.s32 %v52, %v78
    %v80 = vsub.s32 0, %v79
    %v81 = vsel %vm50, %v80, %v79
    %vm82 = vcmp.lt.s32.totalorder %v19, 0
    %v83 = vsub.s32 0, %v19
    %v84 = vsel %vm82, %v83, %v19
    %v85 = vand.u32 %v84, 65535
    %v86 = vshrl.u32 %v84, 16
    %v88 = vmul.u32 %v85, 9362
    %v89 = vmul.u32 %v85, 37449
    %v90 = vmul.u32 %v86, 9362
    %v91 = vmul.u32 %v86, 37449
    %v92 = vshll.u32 %v89, 16
    %v93 = vshrl.u32 %v89, 16
    %v94 = vshll.u32 %v90, 16
    %v95 = vshrl.u32 %v90, 16
    %vm96 = vc.u32 %v88, %v92
    %v97 = vsel %vm96, 1, 0
    %v98 = vadd.s32 %v88, %v92
    %v99 = vadd.s32 %v91, %v97
    %vm100 = vc.u32 %v98, %v94
    %v101 = vsel %vm100, 1, 0
    %v102 = vadd.s32 %v98, %v94
    %v103 = vadd.s32 %v99, %v101
    %v104 = vadd.s32 %v103, %v93
    %v105 = vadd.s32 %v104, %v95
    %vm106 = vc.u32 %v102, 2454267026
    %v107 = vsel %vm106, 1, 0
    %v108 = vadd.s32 %v105, %v107
    %v109 = vshrl.u32 %v108, 3
    %v110 = vmul.u32 %v109, 14
    %v111 = vsub.s32 %v84, %v110
    %v112 = vsub.s32 0, %v111
    %v113 = vsel %vm82, %v112, %v111
    %vm114 = vcmp.ne.s32.totalorder %v81, 0
    %vm115 = vcmp.ne.s32.totalorder %v113, 0
    %vm116 = vcmp.lt.s32.totalorder %v81, 0
    %vm117 = vcmp.lt.s32.totalorder %v113, 0
    %vm118 = vmand %vm116, %vm114
    %vm119 = vmand %vm117, %vm115
    %v120 = vadd.s32 %v81, 14
    %v121 = vadd.s32 %v113, 14
    %v122 = vsel %vm118, %v120, %v81
    %v123 = vsel %vm119, %v121, %v113
    %vm124 = vcmp.ne.s32.totalorder %v122, 0
    %vm125 = vcmp.ne.s32.totalorder %v123, 0
    %vm126 = vmand %vm48, %vm124
    %vm127 = vmand %vm49, %vm125
    %v128 = vsub.f32 %v15, %v46
    %v129 = vsub.f32 %v16, %v47
    %v130 = vsel %vm126, 1, 0
    %v131 = vsel %vm127, 1, 0
    %vm132 = vcmp.eq.s32.totalorder %v130, 1
    %vm133 = vcmp.eq.s32.totalorder %v131, 1
    %v134 = vsel %vm132, %v128, 0.0
    %v135 = vsel %vm133, %v129, 0.0
    %v136 = vmul.f32 %v39, %v39
    %v137 = vmul.f32 %v40, %v40
    %v138 = vmul.f32 %v134, %v134
    %v139 = vmul.f32 %v135, %v135
    %v140 = vadd.f32 %v136, %v138
    %v141 = vadd.f32 %v137, %v139
    %v142 = vadd.f32 %v140, %v141
    %143 = vadd.xlane.f32.xlu0 %v142
    %v144 = vpop.xlane.xlu0 %143
    %v145 = vrot.slane %v144, 4
    %v146 = vadd.f32 %v144, %v145
    %v147 = vrot.slane %v146, 2
    %v148 = vadd.f32 %v146, %v147
    %v149 = vrot.slane %v148, 1
    %v150 = vadd.f32 %v148, %v149
    %v151 = vld [vmem:[#allocation2] sm:$0x1]
    %v152 = vmul.f32 %v150, 0.0625
    %v153 = vadd.f32 %v151, %v152
    %vm154 = vcmask 0
    %155 = vst.msk [vmem:[#allocation2] sm:$0x1] %vm154, %v153
    // Predicated region
    $region10: #{tv_loss.1} parent=1 // pred_check
      _
    $region11: #{tv_loss.1} parent=1 // pred_check_branch
      %157 = sbr.rel (0) target = $region13
    $region12: #{tv_loss.1} parent=1 // pred_region
      %159 = vsyncadd [#allocation3], 0
      %s161 = sshll.u32 [#allocation2], 4
      %s162 = int_to_ptr.vmem [resolvable:$true] %s161
      %s163 = sshll.u32 %s1, 4
      %s164 = int_to_ptr.hbm [resolvable:$true] %s163
      %166 = dma.vmem_to_hbm [thread:$0]  %s162, 16, %s164, [#allocation3]
    $region13: #{tv_loss.1} parent=1 // pred_fallthru
      _
    // Predicated region
    $region14: #{tv_loss.1} parent=1 // pred_check
      _
    $region15: #{tv_loss.1} parent=1 // pred_check_branch
      %168 = sbr.rel (0) target = $region17
    $region16: #{tv_loss.1} parent=1 // pred_region
      %170 = dma.done [#allocation3], 16
    $region17: #{tv_loss.1} parent=1 // pred_fallthru
      _
    %171 = vsyncpa [#allocation3], 1

</llo_original>
